<compile_context>
chip_gen: v7x
topology: tpu7x:2x2x1
jax: 0.10.0
libtpu: 0.0.40
codegen_flags: <defaults>
</compile_context>

<pallas_src>
import jax
import jax.numpy as jnp
import numpy as np
from jax.experimental import pallas as pl
from jax.experimental.pallas import tpu as pltpu

_LANES = 128      # vreg lane width
_SUBLANES = 8     # vreg sublane count (f32)


def _log_kernel(x_ref, o_ref):
    # Pure elementwise op on the resident tile: compute in f32, store in the
    # output dtype. One EUP `log` per element, no temporaries beyond the tile.
    x = x_ref[...].astype(jnp.float32)
    o_ref[...] = jnp.log(x).astype(o_ref.dtype)


def _lane_dense_2d(shape):
    """Pick a (rows, cols) view of the flattened array with cols a multiple of
    128 when possible (lane-dense loads/stores). Falls back to keeping the
    original trailing dim on lanes if the element count is not 128-divisible."""
    if len(shape) == 0:
        return 1, 1
    n = int(np.prod(shape))
    target_cols = 1024  # a few vregs wide; keeps rows large enough to tile
    if n % _LANES == 0:
        cols = _LANES
        while cols * 2 <= target_cols and n % (cols * 2) == 0:
            cols *= 2
        return n // cols, cols
    last = shape[-1]
    if last > 0 and n % last == 0:
        return n // last, last
    return 1, n


def _pick_block_rows(rows, cols, vmem_block_budget_bytes):
    """Largest row-tile whose double-buffered (input + output) f32 working set
    fits the budget, and that satisfies the (8, 128) block constraint
    (multiple of 8, or the full row extent)."""
    # per row: f32 input block + output block, each double-buffered.
    bytes_per_row = cols * 4 * 2 * 2
    cap = max(_SUBLANES, vmem_block_budget_bytes // max(1, bytes_per_row))
    if rows <= cap:
        return rows
    d = (min(cap, rows) // _SUBLANES) * _SUBLANES
    while d >= _SUBLANES:
        if rows % d == 0:
            return d
        d -= _SUBLANES
    return rows  # no aligned divisor below the cap; fall back to one block


def log_pallas(x: jax.Array, *, block_rows: int | None = None,
               vmem_block_budget_bytes: int = 16 << 20) -> jax.Array:
    """Log.forward for a concrete tensor: elementwise natural log, any shape."""
    orig_shape = x.shape
    rows, cols = _lane_dense_2d(orig_shape)
    x2 = x.reshape(rows, cols)

    if block_rows is None:
        block_rows = _pick_block_rows(rows, cols, vmem_block_budget_bytes)
    assert block_rows == rows or (rows % block_rows == 0 and block_rows % _SUBLANES == 0)

    out2 = pl.pallas_call(
        _log_kernel,
        out_shape=jax.ShapeDtypeStruct((rows, cols), x.dtype),
        grid_spec=pltpu.PrefetchScalarGridSpec(
            num_scalar_prefetch=0,
            grid=(rows // block_rows,),
            in_specs=[pl.BlockSpec((block_rows, cols), lambda i: (i, 0))],
            out_specs=pl.BlockSpec((block_rows, cols), lambda i: (i, 0)),
        ),
        compiler_params=pltpu.CompilerParams(
            # "parallel" row axis -> sharded across both TensorCores on v7x.
            dimension_semantics=("parallel",),
            # Explicit scoped-VMEM limit with headroom over the 16 MiB block
            # budget; safe on v5e/v6e (128 MiB) and v7x (64 MiB physical).
            vmem_limit_bytes=32 << 20,
        ),
    )(x2)
    return out2.reshape(orig_shape)


class LogParams:
    """Deterministic stand-in for the nn.Parameter created in Log.__init__
    (deepz_lambda = -ones(dim)); unused on the concrete-Tensor forward path."""

    def __init__(self, dim):
        self.deepz_lambda = -jnp.ones(dim, dtype=jnp.float32)


def log_reference(x: jnp.ndarray) -> jnp.ndarray:
    """Pure-JAX reference mirroring the PyTorch Tensor path (x.log())."""
    return jnp.log(x)


if __name__ == "__main__":
    key = jax.random.PRNGKey(0)

    # Small shape consistent with the module (batch=2, channels=4, 16x16).
    shape = (2, 4, 16, 16)
    x = jax.random.uniform(key, shape, dtype=jnp.float32, minval=0.1, maxval=5.0)

    params = LogParams(dim=shape[1:])  # parity with __init__ (-ones), unused in forward

    out = jax.block_until_ready(log_pallas(x))
    ref = log_reference(x)
    np.testing.assert_allclose(np.asarray(out), np.asarray(ref), rtol=1e-6, atol=1e-6)
    assert out.shape == x.shape and out.dtype == x.dtype

    # Also exercise the non-128-divisible fallback layout path.
    key2 = jax.random.PRNGKey(0)
    x_odd = jax.random.uniform(key2, (3, 5, 7), dtype=jnp.float32, minval=0.2, maxval=3.0)
    out_odd = jax.block_until_ready(log_pallas(x_odd))
    np.testing.assert_allclose(np.asarray(out_odd), np.asarray(jnp.log(x_odd)),
                               rtol=1e-6, atol=1e-6)

    print("KERNEL_OK")
</pallas_src>

<mosaic_0001>
module attributes {stable_mosaic.version = 11 : i64} {
  func.func @_log_kernel(%arg0: i32, %arg1: memref<2x1024xf32, #tpu.memory_space<vmem>>, %arg2: memref<2x1024xf32, #tpu.memory_space<vmem>>) attributes {dimension_semantics = [#tpu.dimension_semantics<parallel>], iteration_bounds = array<i64: 1>, scalar_prefetch = 0 : i64, scratch_operands = 0 : i64, tpu.core_type = #tpu.core_type<tc>, window_params = [{transform_indices = @transform_0, window_bounds = array<i64: 2, 1024>}, {transform_indices = @transform_1, window_bounds = array<i64: 2, 1024>}]} {
    %c0 = arith.constant 0 : index
    %c0_0 = arith.constant 0 : index
    %0 = vector.load %arg1[%c0, %c0_0] : memref<2x1024xf32, #tpu.memory_space<vmem>>, vector<2x1024xf32>
    %1 = math.log %0 : vector<2x1024xf32>
    %c0_1 = arith.constant 0 : index
    %c0_2 = arith.constant 0 : index
    %2 = vector.load %arg2[%c0_1, %c0_2] : memref<2x1024xf32, #tpu.memory_space<vmem>>, vector<2x1024xf32>
    tpu.vector_store %arg2[%c0_1, %c0_2], %1 {strides = array<i32>} : memref<2x1024xf32, #tpu.memory_space<vmem>>, vector<2x1024xf32>,
    return
  }
  func.func @transform_0(%arg0: i32) -> (i32, i32) {
    %c0_i32 = arith.constant 0 : i32
    %c0_i32_0 = arith.constant 0 : i32
    return %arg0, %c0_i32 : i32, i32
  }
  func.func @transform_1(%arg0: i32) -> (i32, i32) {
    %c0_i32 = arith.constant 0 : i32
    %c0_i32_0 = arith.constant 0 : i32
    return %arg0, %c0_i32 : i32, i32
  }
}

</mosaic_0001>

<llo_original>
// kernel: tpu_custom_call.1
$region0: #{tpu_custom_call.1}
  #allocation0 [shape = 'u32[]', space=smem, size = 0x4, offset = 0x4, fixed_abs, tag = 'smem constant byte address 0x4 - core index']
  #allocation1 [shape = 'u32[144,128]{1,0:T(1,128)}', space=vmem, size = 0x12000, scoped, tag = 'internal scratch']
  %s0 = inlined_call_operand.hbm [shape: f32[2,1024], index: 0, kind: input, shape index: {}]
  %s1 = inlined_call_operand.hbm [shape: f32[2,1024], index: 1, kind: output, shape index: {}]
  %s2 = sld [smem:[#allocation0]]
  $region18: #{tpu_custom_call.1} parent=0
    _
  %s4 = ssub.s32 1, %s2
  %s5 = scalar_select 0, %s4, %s2
  $region1: #{tpu_custom_call.1} parent=0
    #allocation2 [shape = 'u8[8192]{0}', space=vmem, size = 0x2000, scoped, tag = 'input window, operand 0, single buffered']
    #allocation3 [shape = 's32[1]{0}', space=sflag, size = 0x4, scoped, tag = 'scoped memory for tpu_custom_call.1']
    #allocation4 [shape = 's32[1]{0}', space=sflag, size = 0x4, scoped, tag = 'scoped memory for tpu_custom_call.1']
    #allocation5 [shape = 'u8[8192]{0}', space=vmem, size = 0x2000, scoped, tag = 'output window, operand 0, single buffered']
    %6 = vsyncpa [#allocation3], 0
    %7 = vsyncpa [#allocation4], 0
    // Predicated region
    $region2: #{tpu_custom_call.1} parent=1 // pred_check
      _
    $region3: #{tpu_custom_call.1} parent=1 // pred_check_branch
      %9 = sbr.rel (0) target = $region5
    $region4: #{tpu_custom_call.1} parent=1 // pred_region
      %s11 = ssub.s32 256, 256
      %12 = vsyncadd [#allocation3], %s11
      %s14 = sshll.u32 [#allocation2], 4
      %s15 = int_to_ptr.vmem [resolvable:$true] %s14
      %17 = dma.hbm_to_vmem [thread:$0]  %s0, 256, %s15, [#allocation3]
    $region5: #{tpu_custom_call.1} parent=1 // pred_fallthru
      _
    // Predicated region
    $region6: #{tpu_custom_call.1} parent=1 // pred_check
      _
    $region7: #{tpu_custom_call.1} parent=1 // pred_check_branch
      %19 = sbr.rel (0) target = $region9
    $region8: #{tpu_custom_call.1} parent=1 // pred_region
      %20 = dma.done [#allocation3], 256
    $region9: #{tpu_custom_call.1} parent=1 // pred_fallthru
      _
    %v21 = vld [vmem:[#allocation2] sm:$0xff]
    %v22 = vld [vmem:[#allocation2 + $0x8] sm:$0xff]
    %v23 = vlog2.pop %v21
    %v24 = vmul.f32 %v23, 0.6931472
    %v25 = vlog2.pop %v22
    %v26 = vmul.f32 %v25, 0.6931472
    %27 = vst [vmem:[#allocation5] sm:$0xff] %v24
    %28 = vst [vmem:[#allocation5 + $0x8] sm:$0xff] %v26
    // Predicated region
    $region10: #{tpu_custom_call.1} parent=1 // pred_check
      _
    $region11: #{tpu_custom_call.1} parent=1 // pred_check_branch
      %30 = sbr.rel (0) target = $region13
    $region12: #{tpu_custom_call.1} parent=1 // pred_region
      %s32 = ssub.s32 256, 256
      %33 = vsyncadd [#allocation4], %s32
      %s35 = sshll.u32 [#allocation5], 4
      %s36 = int_to_ptr.vmem [resolvable:$true] %s35
      %38 = dma.vmem_to_hbm [thread:$0]  %s36, 256, %s1, [#allocation4]
    $region13: #{tpu_custom_call.1} parent=1 // pred_fallthru
      _
    // Predicated region
    $region14: #{tpu_custom_call.1} parent=1 // pred_check
      _
    $region15: #{tpu_custom_call.1} parent=1 // pred_check_branch
      %40 = sbr.rel (0) target = $region17
    $region16: #{tpu_custom_call.1} parent=1 // pred_region
      %41 = dma.done [#allocation4], 256
    $region17: #{tpu_custom_call.1} parent=1 // pred_fallthru
      _
    %42 = vsyncpa [#allocation3], 1
    %43 = vsyncpa [#allocation4], 1

</llo_original>
